<compile_context>
chip_gen: v7x
topology: tpu7x:2x2x1
jax: 0.10.0
libtpu: 0.0.40
codegen_flags: <defaults>
</compile_context>

<pallas_src>
import functools

import jax
import jax.numpy as jnp
from jax import lax
from jax.experimental import pallas as pl
from jax.experimental.pallas import tpu as pltpu

_IGNORE_INDEX = -100   # torch.nn.CrossEntropyLoss default
_ROW_SPLITS = 2        # leading "parallel" grid axis -> both TensorCores on v7x


def _cross_entropy_kernel(logits_ref, target_ref, sum_ref, cnt_ref, *,
                          total_n, tiles_per_split, ignore_index):
    """Per-tile cross-entropy partial reduction.

    logits_ref: (TN, C) native dtype     target_ref: (TN, 1) int32
    sum_ref / cnt_ref: (1, 1, 1) f32 output blocks, stationary across the inner
    (reduction) axis, one block per outer split -> per-core partials.
    """
    p = pl.program_id(0)   # split ("parallel"; one per TensorCore on v7x)
    i = pl.program_id(1)   # row tile within the split ("arbitrary")

    @pl.when(i == 0)
    def _init():
        sum_ref[...] = jnp.zeros_like(sum_ref)
        cnt_ref[...] = jnp.zeros_like(cnt_ref)

    x = logits_ref[...].astype(jnp.float32)     # upcast in-kernel; DMA stays narrow
    tn, c = x.shape
    tgt = target_ref[...]                       # (TN, 1) int32

    # Logical (unclamped) rows this grid step is responsible for.  Blocks whose
    # logical index overruns the row range are clamped in the index_map (they
    # re-read the last block) and every one of their rows is masked off here.
    row0 = (p * tiles_per_split + i) * tn
    row_ids = row0 + lax.broadcasted_iota(jnp.int32, (tn, 1), 0)
    valid = (row_ids < total_n) & (tgt != ignore_index)

    # Numerically stable log-sum-exp along the class (lane) axis.  Garbage in
    # padded / clamped rows stays confined to those rows (row-wise ops only) and
    # is discarded by the final `valid` select, so no sanitizing pass is needed.
    m = jnp.max(x, axis=-1, keepdims=True)                                  # XLU
    e = jnp.exp(x - m)                                                      # EUP
    sel = jnp.where(lax.broadcasted_iota(jnp.int32, (tn, c), 1) == tgt, x, 0.0)

    if c >= 128:
        # Offload the two lane-sum reductions to the otherwise idle MXU.
        ones = jnp.ones((c, 1), dtype=jnp.float32)
        denom = jnp.dot(e, ones, preferred_element_type=jnp.float32)        # (TN, 1)
        picked = jnp.dot(sel, ones, preferred_element_type=jnp.float32)     # (TN, 1)
    else:
        denom = jnp.sum(e, axis=-1, keepdims=True)
        picked = jnp.sum(sel, axis=-1, keepdims=True)

    lse = m + jnp.log(denom)
    per_sample = jnp.where(valid, lse - picked, 0.0)                        # (TN, 1)

    sum_ref[...] += jnp.sum(per_sample, keepdims=True)              # (1,1) -> bcast
    cnt_ref[...] += jnp.sum(valid.astype(jnp.float32), keepdims=True)


def _vmem_budget():
    """Generation-aware (budget_bytes, vmem_limit_bytes)."""
    cap = 64 * 1024 * 1024                     # conservative fallback (v7x per-core)
    try:
        cap = int(pltpu.get_tpu_info().vmem_capacity_bytes)
    except Exception:
        pass
    budget = min((2 * cap) // 5, 40 * 1024 * 1024)        # v6e/v5e: 40 MiB, v7x: ~25 MiB
    limit = max(32 * 1024 * 1024,
                min((3 * cap) // 4, budget + 24 * 1024 * 1024))
    return budget, limit


def _pick_block_rows(n, c, itemsize, *, budget_bytes, max_rows_cap=None):
    """Rows per tile, budgeted against the REAL per-tile VMEM footprint:
    double-buffered native logits tile + ~5x f32 in-kernel temporaries
    (upcast x, exp, one-hot select, iota, ...) + the 128x lane-padded,
    double-buffered (TN, 1) int32 target block."""
    align = max(8, 32 // max(itemsize, 1))          # 8 rows f32, 16 bf16, 32 int8
    per_row = 2 * c * itemsize + 5 * c * 4 + 2 * 128 * 4
    max_rows = max(1, budget_bytes // per_row)
    if max_rows_cap is not None:
        max_rows = min(max_rows, max_rows_cap)
    if n <= max_rows:
        return n                                    # one block == full dim, always legal
    return max(align, (max_rows // align) * align)


def set_criterion(output, target, *, ignore_index=_IGNORE_INDEX, max_block_rows=None):
    """output: (N, C) logits (any float dtype); target: (N,) int class indices.
    Returns the scalar mean cross-entropy loss (f32)."""
    # TODO(synk): class weights / label_smoothing of nn.CrossEntropyLoss are not
    #             implemented (the module uses the defaults, so they are unused).
    n, c = output.shape
    target2d = target.astype(jnp.int32).reshape(n, 1)

    budget, vmem_limit = _vmem_budget()
    tn = _pick_block_rows(n, c, output.dtype.itemsize,
                          budget_bytes=budget, max_rows_cap=max_block_rows)
    num_tiles = pl.cdiv(n, tn)
    splits = min(_ROW_SPLITS, num_tiles)
    tiles_per_split = pl.cdiv(num_tiles, splits)

    def row_block(p, i):
        # Clamp so a split whose tail overruns the row range re-reads the last
        # in-range block; the kernel masks every row of such redundant steps.
        return (jnp.minimum(p * tiles_per_split + i, num_tiles - 1), 0)

    kernel = functools.partial(_cross_entropy_kernel, total_n=n,
                               tiles_per_split=tiles_per_split,
                               ignore_index=ignore_index)

    sums, cnts = pl.pallas_call(
        kernel,
        out_shape=(jax.ShapeDtypeStruct((splits, 1, 1), jnp.float32),
                   jax.ShapeDtypeStruct((splits, 1, 1), jnp.float32)),
        grid_spec=pltpu.PrefetchScalarGridSpec(
            num_scalar_prefetch=0,
            grid=(splits, tiles_per_split),
            in_specs=[
                pl.BlockSpec((tn, c), row_block),   # logits: row tiles, full class axis
                pl.BlockSpec((tn, 1), row_block),   # targets: matching row tiles
            ],
            out_specs=[
                pl.BlockSpec((1, 1, 1), lambda p, i: (p, 0, 0)),  # per-split loss sum
                pl.BlockSpec((1, 1, 1), lambda p, i: (p, 0, 0)),  # per-split valid count
            ],
        ),
        compiler_params=pltpu.CompilerParams(
            dimension_semantics=("parallel", "arbitrary"),
            vmem_limit_bytes=vmem_limit,
        ),
    )(output, target2d)                             # native dtype in; upcast in-kernel

    # TODO(synk): if C ever grows so large that the (TN, C) f32 temps cannot fit
    #             with TN >= 8, add a class-axis grid dim with online max/sum
    #             accumulators instead of shrinking TN further.
    return jnp.sum(sums) / jnp.sum(cnts)


def _reference_ce(logits, target, ignore_index=_IGNORE_INDEX):
    x = logits.astype(jnp.float32)
    lse = jax.scipy.special.logsumexp(x, axis=-1)
    picked = jnp.take_along_axis(x, jnp.maximum(target, 0)[:, None], axis=-1)[:, 0]
    valid = target != ignore_index
    per = jnp.where(valid, lse - picked, 0.0)
    return jnp.sum(per) / jnp.sum(valid.astype(jnp.float32))


if __name__ == "__main__":
    key = jax.random.PRNGKey(0)
    k1, k2, k3, k4 = jax.random.split(key, 4)

    # 1) Small case matching the module's toy usage (single tile, VPU-sum path).
    N, C = 8, 32
    logits = jax.random.normal(k1, (N, C), dtype=jnp.float32)
    target = jax.random.randint(k2, (N,), 0, C, dtype=jnp.int32)
    loss = jax.block_until_ready(set_criterion(logits, target))
    ref = _reference_ce(logits, target)
    assert jnp.allclose(loss, ref, atol=1e-5, rtol=1e-5), (loss, ref)

    # 2) bf16 case with ignore_index, forced small tiles -> multi-tile pipeline,
    #    2-way row split, clamped redundant tail block, MXU-reduce path.
    N2, C2 = 1030, 256
    logits2 = jax.random.normal(k3, (N2, C2), dtype=jnp.bfloat16)
    target2 = jax.random.randint(k4, (N2,), 0, C2, dtype=jnp.int32)
    target2 = target2.at[::37].set(_IGNORE_INDEX)
    loss2 = jax.block_until_ready(set_criterion(logits2, target2, max_block_rows=128))
    ref2 = _reference_ce(logits2, target2)
    assert jnp.allclose(loss2, ref2, atol=1e-3, rtol=1e-3), (loss2, ref2)

    # 3) Same data through the default (VMEM-budgeted) tiling.
    loss3 = jax.block_until_ready(set_criterion(logits2, target2))
    assert jnp.allclose(loss3, ref2, atol=1e-3, rtol=1e-3), (loss3, ref2)

    print("KERNEL_OK")
</pallas_src>

<mosaic_0001>
module attributes {stable_mosaic.version = 11 : i64} {
  func.func @_cross_entropy_kernel(%arg0: i32, %arg1: i32, %arg2: memref<8x32xf32, #tpu.memory_space<vmem>>, %arg3: memref<8x1xi32, #tpu.memory_space<vmem>>, %arg4: memref<1x1x1xf32, #tpu.memory_space<vmem>>, %arg5: memref<1x1x1xf32, #tpu.memory_space<vmem>>) attributes {dimension_semantics = [#tpu.dimension_semantics<parallel>, #tpu.dimension_semantics<arbitrary>], iteration_bounds = array<i64: 1, 1>, scalar_prefetch = 0 : i64, scratch_operands = 0 : i64, tpu.core_type = #tpu.core_type<tc>, window_params = [{transform_indices = @transform_0, window_bounds = array<i64: 8, 32>}, {transform_indices = @transform_1, window_bounds = array<i64: 8, 1>}, {transform_indices = @transform_2, window_bounds = array<i64: 1, 1, 1>}, {transform_indices = @transform_3, window_bounds = array<i64: 1, 1, 1>}]} {
    %c0_i32 = arith.constant 0 : i32
    %0 = arith.cmpi eq, %arg1, %c0_i32 : i32
    %1 = arith.extui %0 : i1 to i32
    %c0_i32_0 = arith.constant 0 : i32
    %2 = arith.cmpi ne, %1, %c0_i32_0 : i32
    scf.if %2 {
      %cst_23 = arith.constant 0.000000e+00 : f32
      %55 = vector.broadcast %cst_23 : f32 to vector<1x1x1xf32>
      %c0_24 = arith.constant 0 : index
      %c0_25 = arith.constant 0 : index
      %c0_26 = arith.constant 0 : index
      %56 = vector.load %arg4[%c0_24, %c0_25, %c0_26] : memref<1x1x1xf32, #tpu.memory_space<vmem>>, vector<1x1x1xf32>
      tpu.vector_store %arg4[%c0_24, %c0_25, %c0_26], %55 {strides = array<i32>} : memref<1x1x1xf32, #tpu.memory_space<vmem>>, vector<1x1x1xf32>,
      %cst_27 = arith.constant 0.000000e+00 : f32
      %57 = vector.broadcast %cst_27 : f32 to vector<1x1x1xf32>
      %c0_28 = arith.constant 0 : index
      %c0_29 = arith.constant 0 : index
      %c0_30 = arith.constant 0 : index
      %58 = vector.load %arg5[%c0_28, %c0_29, %c0_30] : memref<1x1x1xf32, #tpu.memory_space<vmem>>, vector<1x1x1xf32>
      tpu.vector_store %arg5[%c0_28, %c0_29, %c0_30], %57 {strides = array<i32>} : memref<1x1x1xf32, #tpu.memory_space<vmem>>, vector<1x1x1xf32>,
    } else {
    }
    %c0 = arith.constant 0 : index
    %c0_1 = arith.constant 0 : index
    %3 = vector.load %arg2[%c0, %c0_1] : memref<8x32xf32, #tpu.memory_space<vmem>>, vector<8x32xf32>
    %c0_2 = arith.constant 0 : index
    %c0_3 = arith.constant 0 : index
    %4 = vector.load %arg3[%c0_2, %c0_3] : memref<8x1xi32, #tpu.memory_space<vmem>>, vector<8x1xi32>
    %c1_i32 = arith.constant 1 : i32
    %5 = arith.muli %arg0, %c1_i32 : i32
    %6 = arith.addi %5, %arg1 : i32
    %c8_i32 = arith.constant 8 : i32
    %7 = arith.muli %6, %c8_i32 : i32
    %8 = tpu.iota {dimensions = array<i32: 0>} : vector<8x1xi32>
    %9 = vector.broadcast %7 : i32 to vector<8x1xi32>
    %10 = arith.addi %9, %8 : vector<8x1xi32>
    %c8_i32_4 = arith.constant 8 : i32
    %11 = vector.broadcast %c8_i32_4 : i32 to vector<8x1xi32>
    %12 = arith.cmpi slt, %10, %11 : vector<8x1xi32>
    %c-100_i32 = arith.constant -100 : i32
    %13 = vector.broadcast %c-100_i32 : i32 to vector<8x1xi32>
    %14 = arith.cmpi ne, %4, %13 : vector<8x1xi32>
    %15 = arith.andi %12, %14 : vector<8x1xi1>
    %cst = arith.constant dense<0xFF800000> : vector<8xf32>
    %16 = vector.multi_reduction <maximumf>, %3, %cst [1] : vector<8x32xf32> to vector<8xf32>
    %17 = vector.shape_cast %16 : vector<8xf32> to vector<8x1xf32>
    %18 = vector.broadcast %17 : vector<8x1xf32> to vector<8x32xf32>
    %19 = arith.subf %3, %18 : vector<8x32xf32>
    %20 = math.exp %19 : vector<8x32xf32>
    %21 = tpu.iota {dimensions = array<i32: 1>} : vector<8x32xi32>
    %22 = vector.broadcast %4 : vector<8x1xi32> to vector<8x32xi32>
    %23 = arith.cmpi eq, %21, %22 : vector<8x32xi32>
    %cst_5 = arith.constant 0.000000e+00 : f32
    %24 = vector.broadcast %cst_5 : f32 to vector<8x32xf32>
    %25 = arith.select %23, %3, %24 : vector<8x32xi1>, vector<8x32xf32>
    %cst_6 = arith.constant dense<0.000000e+00> : vector<8xf32>
    %26 = vector.multi_reduction <add>, %20, %cst_6 [1] : vector<8x32xf32> to vector<8xf32>
    %27 = vector.shape_cast %26 : vector<8xf32> to vector<8x1xf32>
    %cst_7 = arith.constant dense<0.000000e+00> : vector<8xf32>
    %28 = vector.multi_reduction <add>, %25, %cst_7 [1] : vector<8x32xf32> to vector<8xf32>
    %29 = vector.shape_cast %28 : vector<8xf32> to vector<8x1xf32>
    %30 = math.log %27 : vector<8x1xf32>
    %31 = arith.addf %17, %30 : vector<8x1xf32>
    %32 = arith.subf %31, %29 : vector<8x1xf32>
    %cst_8 = arith.constant 0.000000e+00 : f32
    %33 = vector.broadcast %cst_8 : f32 to vector<8x1xf32>
    %34 = arith.select %15, %32, %33 : vector<8x1xi1>, vector<8x1xf32>
    %c0_9 = arith.constant 0 : index
    %c0_10 = arith.constant 0 : index
    %c0_11 = arith.constant 0 : index
    %35 = vector.load %arg4[%c0_9, %c0_10, %c0_11] : memref<1x1x1xf32, #tpu.memory_space<vmem>>, vector<1x1x1xf32>
    %36 = vector.shape_cast %34 : vector<8x1xf32> to vector<1x8x1xf32>
    %cst_12 = arith.constant dense<0.000000e+00> : vector<1xf32>
    %37 = vector.multi_reduction <add>, %36, %cst_12 [1, 2] : vector<1x8x1xf32> to vector<1xf32>
    %38 = vector.shape_cast %37 : vector<1xf32> to vector<1x1x1xf32>
    %39 = vector.extract %38[0, 0, 0] : f32 from vector<1x1x1xf32>
    %40 = vector.broadcast %39 : f32 to vector<1x1xf32>
    %41 = vector.shape_cast %40 : vector<1x1xf32> to vector<1x1x1xf32>
    %42 = arith.addf %35, %41 : vector<1x1x1xf32>
    %c0_13 = arith.constant 0 : index
    %c0_14 = arith.constant 0 : index
    %c0_15 = arith.constant 0 : index
    %43 = vector.load %arg4[%c0_13, %c0_14, %c0_15] : memref<1x1x1xf32, #tpu.memory_space<vmem>>, vector<1x1x1xf32>
    tpu.vector_store %arg4[%c0_13, %c0_14, %c0_15], %42 {strides = array<i32>} : memref<1x1x1xf32, #tpu.memory_space<vmem>>, vector<1x1x1xf32>,
    %c0_16 = arith.constant 0 : index
    %c0_17 = arith.constant 0 : index
    %c0_18 = arith.constant 0 : index
    %44 = vector.load %arg5[%c0_16, %c0_17, %c0_18] : memref<1x1x1xf32, #tpu.memory_space<vmem>>, vector<1x1x1xf32>
    %45 = arith.extui %15 : vector<8x1xi1> to vector<8x1xi32>
    %46 = arith.sitofp %45 : vector<8x1xi32> to vector<8x1xf32>
    %47 = vector.shape_cast %46 : vector<8x1xf32> to vector<1x8x1xf32>
    %cst_19 = arith.constant dense<0.000000e+00> : vector<1xf32>
    %48 = vector.multi_reduction <add>, %47, %cst_19 [1, 2] : vector<1x8x1xf32> to vector<1xf32>
    %49 = vector.shape_cast %48 : vector<1xf32> to vector<1x1x1xf32>
    %50 = vector.extract %49[0, 0, 0] : f32 from vector<1x1x1xf32>
    %51 = vector.broadcast %50 : f32 to vector<1x1xf32>
    %52 = vector.shape_cast %51 : vector<1x1xf32> to vector<1x1x1xf32>
    %53 = arith.addf %44, %52 : vector<1x1x1xf32>
    %c0_20 = arith.constant 0 : index
    %c0_21 = arith.constant 0 : index
    %c0_22 = arith.constant 0 : index
    %54 = vector.load %arg5[%c0_20, %c0_21, %c0_22] : memref<1x1x1xf32, #tpu.memory_space<vmem>>, vector<1x1x1xf32>
    tpu.vector_store %arg5[%c0_20, %c0_21, %c0_22], %53 {strides = array<i32>} : memref<1x1x1xf32, #tpu.memory_space<vmem>>, vector<1x1x1xf32>,
    return
  }
  func.func @transform_0(%arg0: i32, %arg1: i32) -> (i32, i32) {
    %c1_i32 = arith.constant 1 : i32
    %0 = arith.muli %arg0, %c1_i32 : i32
    %1 = arith.addi %0, %arg1 : i32
    %c0_i32 = arith.constant 0 : i32
    %2 = arith.minsi %1, %c0_i32 : i32
    %c0_i32_0 = arith.constant 0 : i32
    %c0_i32_1 = arith.constant 0 : i32
    return %2, %c0_i32_0 : i32, i32
  }
  func.func @transform_1(%arg0: i32, %arg1: i32) -> (i32, i32) {
    %c1_i32 = arith.constant 1 : i32
    %0 = arith.muli %arg0, %c1_i32 : i32
    %1 = arith.addi %0, %arg1 : i32
    %c0_i32 = arith.constant 0 : i32
    %2 = arith.minsi %1, %c0_i32 : i32
    %c0_i32_0 = arith.constant 0 : i32
    %c0_i32_1 = arith.constant 0 : i32
    return %2, %c0_i32_0 : i32, i32
  }
  func.func @transform_2(%arg0: i32, %arg1: i32) -> (i32, i32, i32) {
    %c0_i32 = arith.constant 0 : i32
    %c0_i32_0 = arith.constant 0 : i32
    %c0_i32_1 = arith.constant 0 : i32
    return %arg0, %c0_i32, %c0_i32_0 : i32, i32, i32
  }
  func.func @transform_3(%arg0: i32, %arg1: i32) -> (i32, i32, i32) {
    %c0_i32 = arith.constant 0 : i32
    %c0_i32_0 = arith.constant 0 : i32
    %c0_i32_1 = arith.constant 0 : i32
    return %arg0, %c0_i32, %c0_i32_0 : i32, i32, i32
  }
}

</mosaic_0001>

<llo_original>
// kernel: tpu_custom_call.1
$region0: #{tpu_custom_call.1}
  #allocation0 [shape = 'u32[]', space=smem, size = 0x4, offset = 0x4, fixed_abs, tag = 'smem constant byte address 0x4 - core index']
  #allocation1 [shape = 'u32[144,128]{1,0:T(1,128)}', space=vmem, size = 0x12000, scoped, tag = 'internal scratch']
  %s0 = inlined_call_operand.vmem [shape: f32[8,32], index: 0, kind: input, shape index: {}]
  %s1 = inlined_call_operand.vmem [shape: s32[8,1], index: 1, kind: input, shape index: {}]
  %s2 = inlined_call_operand.hbm [shape: f32[1,1,1], index: 2, kind: output, shape index: {0}]
  %s3 = inlined_call_operand.hbm [shape: f32[1,1,1], index: 3, kind: output, shape index: {1}]
  %4 = xla_tuple %s2, %s3
  %s5 = sld [smem:[#allocation0]]
  $region30: #{tpu_custom_call.1} parent=0
    _
  %s7 = ssub.s32 1, %s5
  %s8 = scalar_select 0, %s7, %s5
  $region1: #{tpu_custom_call.1} parent=0
    #allocation2 [shape = 'u8[512]{0}', space=vmem, size = 0x400, scoped, tag = 'output window, operand 0, single buffered']
    #allocation3 [shape = 's32[1]{0}', space=sflag, size = 0x4, scoped, tag = 'scoped memory for tpu_custom_call.1']
    #allocation4 [shape = 'u8[512]{0}', space=vmem, size = 0x400, scoped, tag = 'output window, operand 1, single buffered']
    #allocation5 [shape = 's32[1]{0}', space=sflag, size = 0x4, scoped, tag = 'scoped memory for tpu_custom_call.1']
    %9 = vsyncpa [#allocation3], 0
    %10 = vsyncpa [#allocation5], 0
    // Predicated region
    $region2: #{tpu_custom_call.1} parent=1 // pred_check
      _
    $region3: #{tpu_custom_call.1} parent=1 // pred_check_branch
      %12 = sbr.rel (0) target = $region5
    $region4: #{tpu_custom_call.1} parent=1 // pred_region
      %s13 = sadd.s32 0, 0
      %p14 = scmp.lt.s32.totalorder %s13, 0
      %s15 = scalar_select %p14, %s13, 0
      %p16 = scmp.lt.s32.totalorder %s15, 0
      %s17 = scalar_select %p16, %s15, 0
      %s18 = smul.addr %s17, 8
      %s19 = scalar_lea.vmem %s0, %s18
      %s20 = sadd.s32 0, 0
      %p21 = scmp.lt.s32.totalorder %s20, 0
      %s22 = scalar_select %p21, %s20, 0
    $region5: #{tpu_custom_call.1} parent=1 // pred_fallthru
      _
    // Predicated region
    $region6: #{tpu_custom_call.1} parent=1 // pred_check
      _
    $region7: #{tpu_custom_call.1} parent=1 // pred_check_branch
      %24 = sbr.rel (0) target = $region9
    $region8: #{tpu_custom_call.1} parent=1 // pred_region
      %s25 = sadd.s32 0, 0
      %p26 = scmp.lt.s32.totalorder %s25, 0
      %s27 = scalar_select %p26, %s25, 0
      %p28 = scmp.lt.s32.totalorder %s27, 0
      %s29 = scalar_select %p28, %s27, 0
      %s30 = smul.addr %s29, 8
      %s31 = scalar_lea.vmem %s1, %s30
      %s32 = sadd.s32 0, 0
      %p33 = scmp.lt.s32.totalorder %s32, 0
      %s34 = scalar_select %p33, %s32, 0
    $region9: #{tpu_custom_call.1} parent=1 // pred_fallthru
      _
    %s35 = sadd.s32 0, 0
    %p36 = scmp.lt.s32.totalorder %s35, 0
    %s37 = scalar_select %p36, %s35, 0
    %p38 = scmp.lt.s32.totalorder %s37, 0
    %s39 = scalar_select %p38, %s37, 0
    %s40 = smul.addr %s39, 8
    %s41 = scalar_lea.vmem %s0, %s40
    %s42 = sadd.s32 0, 0
    %p43 = scmp.lt.s32.totalorder %s42, 0
    %s44 = scalar_select %p43, %s42, 0
    %p45 = scmp.lt.s32.totalorder %s44, 0
    %s46 = scalar_select %p45, %s44, 0
    %s47 = smul.addr %s46, 8
    %s48 = scalar_lea.vmem %s1, %s47
    %s49 = sadd.s32 0, 0
    %p50 = scmp.lt.s32.totalorder %s49, 0
    %s51 = scalar_select %p50, %s49, 0
    %p52 = scmp.lt.s32.totalorder %s51, 0
    %s53 = scalar_select %p52, %s51, 0
    %s54 = smul.addr %s53, 8
    %s55 = scalar_lea.vmem %s0, %s54
    %s56 = sadd.s32 0, 0
    %p57 = scmp.lt.s32.totalorder %s56, 0
    %s58 = scalar_select %p57, %s56, 0
    %s59 = sadd.s32 0, 0
    %p60 = scmp.lt.s32.totalorder %s59, 0
    %s61 = scalar_select %p60, %s59, 0
    %p62 = scmp.lt.s32.totalorder %s61, 0
    %s63 = scalar_select %p62, %s61, 0
    %s64 = smul.addr %s63, 8
    %s65 = scalar_lea.vmem %s1, %s64
    %s66 = sadd.s32 0, 0
    %p67 = scmp.lt.s32.totalorder %s66, 0
    %s68 = scalar_select %p67, %s66, 0
    %p69 = scmp.eq.s32.totalorder 0, 0
    // Predicated region
    $region10: #{tpu_custom_call.1} parent=1 // pred_check
      %p70 = pneg %p69
    $region11: #{tpu_custom_call.1} parent=1 // pred_check_branch
      %72 = sbr.rel (%p70) target = $region13
    $region12: #{tpu_custom_call.1} parent=1 // pred_region
      %vm73 = vcmask 0
      %74 = vst.msk [vmem:[#allocation2] sm:$0x1] %vm73, 0.0
      %75 = vst.msk [vmem:[#allocation4] sm:$0x1] %vm73, 0.0
    $region13: #{tpu_custom_call.1} parent=1 // pred_fallthru
      _
    %v76 = vld [vmem:[%s55] sm:$0xff]
    %v77 = vld [vmem:[%s65] sm:$0xff]
    %s78 = sadd.s32 0, 0
    %s79 = smul.u32 %s78, 8
    %v80 = vlaneseq
    %v81 = vshrl.u32 %v80, 7
    %v82 = vstv %s79
    %v83 = vadd.s32 %v82, %v81
    %vm84 = vcmp.lt.s32.totalorder %v83, 8
    %vm85 = vcmp.ne.s32.totalorder %v77, 4294967196
    %vm86 = vmand %vm84, %vm85
    %vm87 = vcmask 261120
    %v88 = vsel %vm87, %v76, -inf
    %89 = vmax.xlane.f32.xlu0 %v88
    %v90 = vpop.xlane.xlu0 %89
    %v91 = vsub.f32 %v76, %v90
    %v92 = vmul.f32 %v91, 1.442695
    %v93 = vpow.pop %v92
    %v94 = vlaneseq
    %v95 = vand.u32 %v94, 127
    %96 = vset.pattern.permute.xlu0 0
    %97 = vperm.xlu0 %96, %v77
    %v98 = vpop.permute.xlu0 %97
    %vm99 = vcmp.eq.s32.totalorder %v95, %v98
    %v100 = vsel %vm99, %v76, 0.0
    %v101 = vsel %vm87, %v93, 0.0
    %102 = vadd.xlane.f32.xlu0 %v101
    %v103 = vpop.xlane.xlu0 %102
    %v104 = vsel %vm87, %v100, 0.0
    %105 = vadd.xlane.f32.xlu0 %v104
    %v106 = vpop.xlane.xlu0 %105
    %v107 = vlog2.pop %v103
    %v108 = vmul.f32 %v107, 0.6931472
    %v109 = vadd.f32 %v90, %v108
    %v110 = vsub.f32 %v109, %v106
    %v111 = vsel %vm86, %v110, 0.0
    %v112 = vld [vmem:[#allocation2] sm:$0x1]
    %vm113 = vcmask 7168
    %v114 = vsel %vm113, %v111, 0.0
    %115 = vadd.xlane.f32.xlu0 %v114
    %v116 = vpop.xlane.xlu0 %115
    %v117 = vrot.slane %v116, 4
    %v118 = vadd.f32 %v116, %v117
    %v119 = vrot.slane %v118, 2
    %v120 = vadd.f32 %v118, %v119
    %v121 = vrot.slane %v120, 1
    %v122 = vadd.f32 %v120, %v121
    %s123 = vtos %v122
    %v124 = vstv %s123
    %v125 = vadd.f32 %v112, %v124
    %vm126 = vcmask 0
    %127 = vst.msk [vmem:[#allocation2] sm:$0x1] %vm126, %v125
    %v128 = vld [vmem:[#allocation4] sm:$0x1]
    %v129 = vsel %vm86, 1, 0
    %v130 = vcvt.s32.f32 %v129
    %v131 = vsel %vm113, %v130, 0.0
    %132 = vadd.xlane.f32.xlu0 %v131
    %v133 = vpop.xlane.xlu0 %132
    %v134 = vrot.slane %v133, 4
    %v135 = vadd.f32 %v133, %v134
    %v136 = vrot.slane %v135, 2
    %v137 = vadd.f32 %v135, %v136
    %v138 = vrot.slane %v137, 1
    %v139 = vadd.f32 %v137, %v138
    %s140 = vtos %v139
    %v141 = vstv %s140
    %v142 = vadd.f32 %v128, %v141
    %143 = vst.msk [vmem:[#allocation4] sm:$0x1] %vm126, %v142
    // Predicated region
    $region14: #{tpu_custom_call.1} parent=1 // pred_check
      _
    $region15: #{tpu_custom_call.1} parent=1 // pred_check_branch
      %145 = sbr.rel (0) target = $region17
    $region16: #{tpu_custom_call.1} parent=1 // pred_region
      %s147 = ssub.s32 16, 16
      %148 = vsyncadd [#allocation3], %s147
      %s150 = sshll.u32 [#allocation2], 4
      %s151 = int_to_ptr.vmem [resolvable:$true] %s150
      %153 = dma.vmem_to_hbm [thread:$0]  %s151, 16, %s2, [#allocation3]
    $region17: #{tpu_custom_call.1} parent=1 // pred_fallthru
      _
    // Predicated region
    $region18: #{tpu_custom_call.1} parent=1 // pred_check
      _
    $region19: #{tpu_custom_call.1} parent=1 // pred_check_branch
      %155 = sbr.rel (0) target = $region21
    $region20: #{tpu_custom_call.1} parent=1 // pred_region
      %s157 = ssub.s32 16, 16
      %158 = vsyncadd [#allocation5], %s157
      %s160 = sshll.u32 [#allocation4], 4
      %s161 = int_to_ptr.vmem [resolvable:$true] %s160
      %163 = dma.vmem_to_hbm [thread:$0]  %s161, 16, %s3, [#allocation5]
    $region21: #{tpu_custom_call.1} parent=1 // pred_fallthru
      _
    // Predicated region
    $region22: #{tpu_custom_call.1} parent=1 // pred_check
      _
    $region23: #{tpu_custom_call.1} parent=1 // pred_check_branch
      %165 = sbr.rel (0) target = $region25
    $region24: #{tpu_custom_call.1} parent=1 // pred_region
      %166 = dma.done [#allocation3], 16
    $region25: #{tpu_custom_call.1} parent=1 // pred_fallthru
      _
    // Predicated region
    $region26: #{tpu_custom_call.1} parent=1 // pred_check
      _
    $region27: #{tpu_custom_call.1} parent=1 // pred_check_branch
      %168 = sbr.rel (0) target = $region29
    $region28: #{tpu_custom_call.1} parent=1 // pred_region
      %169 = dma.done [#allocation5], 16
    $region29: #{tpu_custom_call.1} parent=1 // pred_fallthru
      _
    %170 = vsyncpa [#allocation3], 1
    %171 = vsyncpa [#allocation5], 1

</llo_original>
